<compile_context>
chip_gen: v7x
topology: tpu7x:2x2x1
jax: 0.10.0
libtpu: 0.0.40
codegen_flags: <defaults>
</compile_context>

<pallas_src>
import math

import jax
import jax.numpy as jnp
from jax.experimental import pallas as pl
from jax.experimental.pallas import tpu as pltpu


def _round_up(x, m):
    return ((x + m - 1) // m) * m


def geometric_root_kernel(emb_ref, ctx_ref, n_ref, z_ref, masked_ref):
    """One grid step == one block of TB batch rows, lane-dense layout.

    emb_ref    : VMEM f32[1 or TB, MAX_N*D]  embedding slab (zeros in ctx lanes)
    ctx_ref    : VMEM f32[TB, D]             per-row context group (zeros in emb lanes)
    n_ref      : VMEM i32[TB, 1]             node counts per batch row
    z_ref      : VMEM f32[TB, MAX_N*D]       Z, flattened (node, feature)
    masked_ref : VMEM f32[TB, MAX_N*D]       zero_mask_nodes(Z, N), flattened
    """
    tb, flat = z_ref.shape
    d = ctx_ref.shape[-1]
    max_n = flat // d

    # Z row slab = emb slab (values in emb lanes, 0 in ctx lanes)
    #            + lane-tiled ctx group (values in ctx lanes, 0 in emb lanes).
    emb = jnp.broadcast_to(emb_ref[...], (tb, flat))
    ctx = jnp.concatenate([ctx_ref[...]] * max_n, axis=-1)      # (tb, max_n*d)
    z = emb + ctx

    # Keep node n of row b iff n < N[b]:  (lane // d) < N  <=>  lane < N * d.
    lane = jax.lax.broadcasted_iota(jnp.int32, (1, flat), 1)
    keep = lane < n_ref[...] * d                                # (tb, flat)

    # Two full-tile, lane-dense stores.
    z_ref[...] = z
    masked_ref[...] = jnp.where(keep, z, jnp.zeros_like(z))


def _num_tensorcores():
    """Best-effort TensorCore count: v7x exposes 2 TCs/chip, v5e/v6e expose 1."""
    try:
        kind = str(jax.devices()[0].device_kind).lower()
        if "v7" in kind:
            return 2
    except Exception:
        pass
    return 1


def _legalize_tb(tb, batch_size):
    """Batch-block size must be a multiple of 8 or the full batch extent."""
    tb = max(1, min(int(tb), batch_size))
    if tb == batch_size:
        return tb
    return min(batch_size, max(8, (tb // 8) * 8))


def _footprint_bytes(tb, flat, d, itemsize, emb_block_rows):
    """Per-step VMEM footprint incl. double buffering and (8,128) padding."""
    lane_pad = _round_up(flat, 128)
    tb_pad = _round_up(tb, 8)
    total = 2 * 2 * tb_pad * lane_pad * itemsize                       # 2 outputs x 2 bufs
    total += 2 * tb_pad * _round_up(d, 128) * itemsize                 # ctx block x 2 bufs
    total += 2 * tb_pad * 128 * 4                                      # N block   x 2 bufs
    total += 2 * _round_up(emb_block_rows, 8) * lane_pad * itemsize    # emb slab  x 2 bufs
    return total


def _pick_batch_block(batch_size, flat, d, itemsize, eb, num_cores,
                      target_block_bytes=1 << 20, vmem_budget_bytes=24 << 20):
    """Batch rows per grid step: ~1 MiB output blocks, VMEM-budgeted, and
    >= 2 (preferably even) grid steps only on multi-TensorCore chips."""
    lane_row_bytes = _round_up(flat, 128) * itemsize

    def fp(tb):
        emb_rows = 1 if (batch_size > eb and eb == 1) else tb
        return _footprint_bytes(tb, flat, d, itemsize, emb_rows)

    tb = max(1, target_block_bytes // lane_row_bytes)
    if num_cores >= 2 and batch_size > 1:
        tb = min(tb, pl.cdiv(batch_size, num_cores))
    tb = _legalize_tb(tb, batch_size)

    # Prefer an even number of grid steps when 2 TensorCores share the grid.
    if num_cores >= 2 and 1 < tb < batch_size:
        steps = pl.cdiv(batch_size, tb)
        if steps > 1 and steps % 2 == 1:
            tb = _legalize_tb(pl.cdiv(batch_size, steps + 1), batch_size)

    # Shrink until the double-buffered footprint fits comfortably (v5e safe).
    while tb > 8 and fp(tb) > vmem_budget_bytes:
        tb = _legalize_tb(tb - 8, batch_size)
    return tb


def geometric_root_forward(node_embeddings, joined_embed, N, batch_size,
                           allow_greater=True, batch_block=None):
    """JAX/Pallas port of GeometricRoot.forward (Z=None path, extra_features=0).

    Returns (noise_masked, None, N, Z) exactly like the PyTorch module.
    """
    eb, max_n, d_e = node_embeddings.shape
    d_c = joined_embed.shape[-1]
    d = d_e + d_c
    flat = max_n * d
    dtype = node_embeddings.dtype
    itemsize = jnp.dtype(dtype).itemsize

    if batch_size > eb and not allow_greater:
        raise ValueError(
            f"Requested batch size {batch_size} with fixed embedding size "
            f"{eb} and no expansion allowed")

    num_cores = _num_tensorcores()
    if batch_block is None:
        tb = _pick_batch_block(batch_size, flat, d, itemsize, eb, num_cores)
    else:
        tb = _legalize_tb(batch_block, batch_size)
    grid = (pl.cdiv(batch_size, tb),)

    # Tiny lane-dense slabs built wrapper-side (layout plumbing, not compute):
    #   emb_slab[e, n*D + j] = node_embeddings[e, n, j]   for j <  d_e, else 0
    #   ctx_group[b, j]      = joined_embed[b, 0, j-d_e]  for j >= d_e, else 0
    emb_slab = jnp.concatenate(
        [node_embeddings, jnp.zeros((eb, max_n, d_c), dtype)], axis=-1
    ).reshape(eb, flat)
    ctx_group = jnp.concatenate(
        [jnp.zeros((batch_size, 1, d_e), dtype), joined_embed.astype(dtype)],
        axis=-1).reshape(batch_size, d)
    n_in = N.astype(jnp.int32).reshape(batch_size, 1)

    # noise = node_embeddings.clone(); repeat / truncate to batch_size, with the
    # repeat expressed in the index_map (no full-batch tile materialisation).
    if batch_size > eb:
        if eb == 1:
            emb_in = emb_slab                                    # (1, flat) resident tile
            emb_spec = pl.BlockSpec((1, flat), lambda b: (0, 0))
            emb_block_rows = 1
        elif tb % 8 == 0:
            # Modular repeat row r -> r % eb via a small lcm(tb, eb)-row tile.
            period = (tb * eb) // math.gcd(tb, eb)
            rep = period // eb
            emb_in = jnp.tile(emb_slab, (rep, 1)) if rep > 1 else emb_slab
            n_blocks = period // tb
            emb_spec = pl.BlockSpec((tb, flat), lambda b, _n=n_blocks: (b % _n, 0))
            emb_block_rows = tb
        else:
            # Tiny-batch corner (tb == batch_size, not 8-aligned): materialise.
            rep = -(-batch_size // eb)
            emb_in = jnp.tile(emb_slab, (rep, 1))[:batch_size]
            emb_spec = pl.BlockSpec((tb, flat), lambda b: (b, 0))
            emb_block_rows = tb
    else:
        emb_in = emb_slab[:batch_size]
        emb_spec = pl.BlockSpec((tb, flat), lambda b: (b, 0))
        emb_block_rows = tb

    ctx_spec = pl.BlockSpec((tb, d), lambda b: (b, 0))
    n_spec = pl.BlockSpec((tb, 1), lambda b: (b, 0))
    out_spec = pl.BlockSpec((tb, flat), lambda b: (b, 0))

    vmem_needed = _footprint_bytes(tb, flat, d, itemsize, emb_block_rows)
    vmem_limit = int(min(32 << 20, max(16 << 20, vmem_needed + (4 << 20))))

    z2, masked2 = pl.pallas_call(
        geometric_root_kernel,
        out_shape=(
            jax.ShapeDtypeStruct((batch_size, flat), dtype),
            jax.ShapeDtypeStruct((batch_size, flat), dtype),
        ),
        grid_spec=pltpu.PrefetchScalarGridSpec(
            num_scalar_prefetch=0,
            grid=grid,
            in_specs=[emb_spec, ctx_spec, n_spec],
            out_specs=[out_spec, out_spec],
        ),
        compiler_params=pltpu.CompilerParams(
            dimension_semantics=("parallel",),
            vmem_limit_bytes=vmem_limit),
    )(emb_in, ctx_group, n_in)

    z = z2.reshape(batch_size, max_n, d)
    masked = masked2.reshape(batch_size, max_n, d)

    # TODO(synk): extra_features>0 path (appending a constant max_N column) is
    # not implemented since the module default is extra_features=0.
    return masked, None, N, z


if __name__ == "__main__":
    MAX_N = 8                 # support of the categorical n_node_dist
    D_E = 16                  # node_embedding_dim
    D_C = 16                  # context_dim

    key = jax.random.PRNGKey(0)
    k_emb, k_ctx, k_n, k_emb2, k_ctx2, k_n2 = jax.random.split(key, 6)

    def reference(emb, ctx, n, batch):
        eb = emb.shape[0]
        rep = int(math.ceil(batch / float(eb)))
        noise = jnp.tile(emb, (rep, 1, 1))[:batch]
        z = jnp.concatenate(
            [noise, jnp.broadcast_to(ctx, (batch, MAX_N, ctx.shape[-1]))], axis=-1)
        keep = jnp.arange(MAX_N)[None, :, None] < n[:, None, None]
        return jnp.where(keep, z, jnp.zeros_like(z)), z

    # ---- case 1: embedding_batch_size == 1, batch divisible by the block
    EMBED_B, BATCH = 1, 16
    node_embeddings = jax.random.normal(k_emb, (EMBED_B, MAX_N, D_E), jnp.float32)
    joined_embed = jax.random.normal(k_ctx, (BATCH, 1, D_C), jnp.float32)
    N = jax.random.randint(k_n, (BATCH,), 0, MAX_N, dtype=jnp.int32) + 1

    noise_masked, _, _, Z = geometric_root_forward(
        node_embeddings, joined_embed, N, BATCH, allow_greater=True)
    jax.block_until_ready((noise_masked, Z))

    masked_ref, z_ref = reference(node_embeddings, joined_embed, N, BATCH)
    assert jnp.allclose(Z, z_ref, atol=1e-6)
    assert jnp.allclose(noise_masked, masked_ref, atol=1e-6)

    # ---- case 2: embedding_batch_size > 1, non-divisible batch (partial block)
    EMBED_B2, BATCH2 = 3, 13
    node_embeddings2 = jax.random.normal(k_emb2, (EMBED_B2, MAX_N, D_E), jnp.float32)
    joined_embed2 = jax.random.normal(k_ctx2, (BATCH2, 1, D_C), jnp.float32)
    N2 = jax.random.randint(k_n2, (BATCH2,), 0, MAX_N, dtype=jnp.int32) + 1

    noise_masked2, _, _, Z2 = geometric_root_forward(
        node_embeddings2, joined_embed2, N2, BATCH2,
        allow_greater=True, batch_block=8)
    jax.block_until_ready((noise_masked2, Z2))

    masked_ref2, z_ref2 = reference(node_embeddings2, joined_embed2, N2, BATCH2)
    assert jnp.allclose(Z2, z_ref2, atol=1e-6)
    assert jnp.allclose(noise_masked2, masked_ref2, atol=1e-6)

    print("KERNEL_OK")
</pallas_src>

<mosaic_0001>
module attributes {stable_mosaic.version = 11 : i64} {
  func.func @geometric_root_kernel(%arg0: i32, %arg1: memref<1x256xf32, #tpu.memory_space<vmem>>, %arg2: memref<16x32xf32, #tpu.memory_space<vmem>>, %arg3: memref<16x1xi32, #tpu.memory_space<vmem>>, %arg4: memref<16x256xf32, #tpu.memory_space<vmem>>, %arg5: memref<16x256xf32, #tpu.memory_space<vmem>>) attributes {dimension_semantics = [#tpu.dimension_semantics<parallel>], iteration_bounds = array<i64: 1>, scalar_prefetch = 0 : i64, scratch_operands = 0 : i64, tpu.core_type = #tpu.core_type<tc>, window_params = [{pipeline_mode = #tpu.pipeline_mode<synchronous>, transform_indices = @transform_0, window_bounds = array<i64: 1, 256>}, {transform_indices = @transform_1, window_bounds = array<i64: 16, 32>}, {transform_indices = @transform_2, window_bounds = array<i64: 16, 1>}, {transform_indices = @transform_3, window_bounds = array<i64: 16, 256>}, {transform_indices = @transform_4, window_bounds = array<i64: 16, 256>}]} {
    %c0 = arith.constant 0 : index
    %c0_0 = arith.constant 0 : index
    %0 = vector.load %arg1[%c0, %c0_0] : memref<1x256xf32, #tpu.memory_space<vmem>>, vector<1x256xf32>
    %1 = vector.shape_cast %0 : vector<1x256xf32> to vector<1x256xf32>
    %2 = vector.broadcast %1 : vector<1x256xf32> to vector<16x256xf32>
    %c0_1 = arith.constant 0 : index
    %c0_2 = arith.constant 0 : index
    %3 = vector.load %arg2[%c0_1, %c0_2] : memref<16x32xf32, #tpu.memory_space<vmem>>, vector<16x32xf32>
    %4 = tpu.concatenate %3, %3, %3, %3, %3, %3, %3, %3 in 1 : vector<16x32xf32>, vector<16x32xf32>, vector<16x32xf32>, vector<16x32xf32>, vector<16x32xf32>, vector<16x32xf32>, vector<16x32xf32>, vector<16x32xf32> -> vector<16x256xf32>
    %5 = arith.addf %2, %4 : vector<16x256xf32>
    %6 = tpu.iota {dimensions = array<i32: 1>} : vector<1x256xi32>
    %c0_3 = arith.constant 0 : index
    %c0_4 = arith.constant 0 : index
    %7 = vector.load %arg3[%c0_3, %c0_4] : memref<16x1xi32, #tpu.memory_space<vmem>>, vector<16x1xi32>
    %c32_i32 = arith.constant 32 : i32
    %8 = vector.broadcast %c32_i32 : i32 to vector<16x1xi32>
    %9 = arith.muli %7, %8 : vector<16x1xi32>
    %10 = vector.broadcast %6 : vector<1x256xi32> to vector<16x256xi32>
    %11 = vector.broadcast %9 : vector<16x1xi32> to vector<16x256xi32>
    %12 = arith.cmpi slt, %10, %11 : vector<16x256xi32>
    %c0_5 = arith.constant 0 : index
    %c0_6 = arith.constant 0 : index
    %13 = vector.load %arg4[%c0_5, %c0_6] : memref<16x256xf32, #tpu.memory_space<vmem>>, vector<16x256xf32>
    tpu.vector_store %arg4[%c0_5, %c0_6], %5 {strides = array<i32>} : memref<16x256xf32, #tpu.memory_space<vmem>>, vector<16x256xf32>,
    %cst = arith.constant 0.000000e+00 : f32
    %14 = vector.broadcast %cst : f32 to vector<16x256xf32>
    %15 = arith.select %12, %5, %14 : vector<16x256xi1>, vector<16x256xf32>
    %c0_7 = arith.constant 0 : index
    %c0_8 = arith.constant 0 : index
    %16 = vector.load %arg5[%c0_7, %c0_8] : memref<16x256xf32, #tpu.memory_space<vmem>>, vector<16x256xf32>
    tpu.vector_store %arg5[%c0_7, %c0_8], %15 {strides = array<i32>} : memref<16x256xf32, #tpu.memory_space<vmem>>, vector<16x256xf32>,
    return
  }
  func.func @transform_0(%arg0: i32) -> (i32, i32) {
    %c0_i32 = arith.constant 0 : i32
    %c0_i32_0 = arith.constant 0 : i32
    %c0_i32_1 = arith.constant 0 : i32
    return %c0_i32, %c0_i32_0 : i32, i32
  }
  func.func @transform_1(%arg0: i32) -> (i32, i32) {
    %c0_i32 = arith.constant 0 : i32
    %c0_i32_0 = arith.constant 0 : i32
    return %arg0, %c0_i32 : i32, i32
  }
  func.func @transform_2(%arg0: i32) -> (i32, i32) {
    %c0_i32 = arith.constant 0 : i32
    %c0_i32_0 = arith.constant 0 : i32
    return %arg0, %c0_i32 : i32, i32
  }
  func.func @transform_3(%arg0: i32) -> (i32, i32) {
    %c0_i32 = arith.constant 0 : i32
    %c0_i32_0 = arith.constant 0 : i32
    return %arg0, %c0_i32 : i32, i32
  }
  func.func @transform_4(%arg0: i32) -> (i32, i32) {
    %c0_i32 = arith.constant 0 : i32
    %c0_i32_0 = arith.constant 0 : i32
    return %arg0, %c0_i32 : i32, i32
  }
}

</mosaic_0001>

<llo_original>
// kernel: tpu_custom_call.1
$region0: #{tpu_custom_call.1}
  #allocation0 [shape = 'u32[]', space=smem, size = 0x4, offset = 0x4, fixed_abs, tag = 'smem constant byte address 0x4 - core index']
  #allocation1 [shape = 'u32[144,128]{1,0:T(1,128)}', space=vmem, size = 0x12000, scoped, tag = 'internal scratch']
  %s0 = inlined_call_operand.vmem [shape: f32[1,256], index: 0, kind: input, shape index: {}]
  %s1 = inlined_call_operand.vmem [shape: f32[16,32], index: 1, kind: input, shape index: {}]
  %s2 = inlined_call_operand.vmem [shape: s32[16,1], index: 2, kind: input, shape index: {}]
  %s3 = inlined_call_operand.hbm [shape: f32[16,256], index: 3, kind: output, shape index: {0}]
  %s4 = inlined_call_operand.hbm [shape: f32[16,256], index: 4, kind: output, shape index: {1}]
  %5 = xla_tuple %s3, %s4
  %s6 = sld [smem:[#allocation0]]
  $region30: #{tpu_custom_call.1} parent=0
    _
  %s8 = ssub.s32 1, %s6
  %s9 = scalar_select 0, %s8, %s6
  $region1: #{tpu_custom_call.1} parent=0
    #allocation2 [shape = 'u8[16384]{0}', space=vmem, size = 0x4000, scoped, tag = 'output window, operand 0, single buffered']
    #allocation3 [shape = 's32[1]{0}', space=sflag, size = 0x4, scoped, tag = 'scoped memory for tpu_custom_call.1']
    #allocation4 [shape = 'u8[16384]{0}', space=vmem, size = 0x4000, scoped, tag = 'output window, operand 1, single buffered']
    #allocation5 [shape = 's32[1]{0}', space=sflag, size = 0x4, scoped, tag = 'scoped memory for tpu_custom_call.1']
    %10 = vsyncpa [#allocation3], 0
    %11 = vsyncpa [#allocation5], 0
    // Predicated region
    $region2: #{tpu_custom_call.1} parent=1 // pred_check
      _
    $region3: #{tpu_custom_call.1} parent=1 // pred_check_branch
      %13 = sbr.rel (0) target = $region5
    $region4: #{tpu_custom_call.1} parent=1 // pred_region
      _
    $region5: #{tpu_custom_call.1} parent=1 // pred_fallthru
      _
    // Predicated region
    $region6: #{tpu_custom_call.1} parent=1 // pred_check
      _
    $region7: #{tpu_custom_call.1} parent=1 // pred_check_branch
      %15 = sbr.rel (0) target = $region9
    $region8: #{tpu_custom_call.1} parent=1 // pred_region
      _
    $region9: #{tpu_custom_call.1} parent=1 // pred_fallthru
      _
    // Predicated region
    $region10: #{tpu_custom_call.1} parent=1 // pred_check
      _
    $region11: #{tpu_custom_call.1} parent=1 // pred_check_branch
      %17 = sbr.rel (0) target = $region13
    $region12: #{tpu_custom_call.1} parent=1 // pred_region
      _
    $region13: #{tpu_custom_call.1} parent=1 // pred_fallthru
      _
    %v18 = vld [vmem:[%s0] sm:$0x3]
    %v20 = vlaneseq
    %v21 = vshrl.u32 %v20, 7
    %v22 = vsub.s32 0, %v21
    %v23 = vrot.slane %v18, %v22
    %v24 = vlaneseq
    %v25 = vshrl.u32 %v24, 7
    %v26 = vsub.s32 1, %v25
    %v27 = vrot.slane %v18, %v26
    %v30 = vld [vmem:[%s1] sm:$0xff]
    %v31 = vld [vmem:[%s1 + $0x8] sm:$0xff]
    %34 = vrot.lane.b32.xlu0 %v30, 32
    %v35 = vpop.permute.xlu0 %34
    %36 = vrot.lane.b32.xlu0 %v31, 32
    %v37 = vpop.permute.xlu0 %36
    %40 = vrot.lane.b32.xlu0 %v30, 64
    %v41 = vpop.permute.xlu0 %40
    %42 = vrot.lane.b32.xlu0 %v31, 64
    %v43 = vpop.permute.xlu0 %42
    %46 = vrot.lane.b32.xlu0 %v30, 96
    %v47 = vpop.permute.xlu0 %46
    %48 = vrot.lane.b32.xlu0 %v31, 96
    %v49 = vpop.permute.xlu0 %48
    %vm52 = vcmask 261120
    %v53 = vsel %vm52, %v30, %v35
    %v54 = vsel %vm52, %v31, %v37
    %vm55 = vcmask 523264
    %v56 = vsel %vm55, %v53, %v41
    %v57 = vsel %vm55, %v54, %v43
    %vm58 = vcmask 785408
    %v59 = vsel %vm58, %v56, %v47
    %v60 = vsel %vm58, %v57, %v49
    %v61 = vadd.f32 %v23, %v59
    %v62 = vadd.f32 %v27, %v59
    %v63 = vadd.f32 %v23, %v60
    %v64 = vadd.f32 %v27, %v60
    %v65 = vlaneseq
    %v66 = vand.u32 %v65, 127
    %v67 = vadd.s32 %v66, 128
    %v68 = vld [vmem:[%s2] sm:$0xff]
    %v69 = vld [vmem:[%s2 + $0x8] sm:$0xff]
    %v70 = vmul.u32 %v68, 32
    %v71 = vmul.u32 %v69, 32
    %72 = vset.pattern.permute.xlu0 0
    %73 = vperm.xlu0 %72, %v70
    %v74 = vpop.permute.xlu0 %73
    %75 = vset.pattern.permute.xlu0 0
    %76 = vperm.xlu0 %75, %v71
    %v77 = vpop.permute.xlu0 %76
    %vm78 = vcmp.lt.s32.totalorder %v66, %v74
    %vm79 = vcmp.lt.s32.totalorder %v67, %v74
    %vm80 = vcmp.lt.s32.totalorder %v66, %v77
    %vm81 = vcmp.lt.s32.totalorder %v67, %v77
    %82 = vst [vmem:[#allocation2] sm:$0xff] %v61
    %83 = vst [vmem:[#allocation2 + $0x8] sm:$0xff] %v62
    %84 = vst [vmem:[#allocation2 + $0x10] sm:$0xff] %v63
    %85 = vst [vmem:[#allocation2 + $0x18] sm:$0xff] %v64
    %v86 = vsel %vm78, %v61, 0.0
    %v87 = vsel %vm79, %v62, 0.0
    %v88 = vsel %vm80, %v63, 0.0
    %v89 = vsel %vm81, %v64, 0.0
    %90 = vst [vmem:[#allocation4] sm:$0xff] %v86
    %91 = vst [vmem:[#allocation4 + $0x8] sm:$0xff] %v87
    %92 = vst [vmem:[#allocation4 + $0x10] sm:$0xff] %v88
    %93 = vst [vmem:[#allocation4 + $0x18] sm:$0xff] %v89
    // Predicated region
    $region14: #{tpu_custom_call.1} parent=1 // pred_check
      _
    $region15: #{tpu_custom_call.1} parent=1 // pred_check_branch
      %95 = sbr.rel (0) target = $region17
    $region16: #{tpu_custom_call.1} parent=1 // pred_region
      %s97 = ssub.s32 512, 512
      %98 = vsyncadd [#allocation3], %s97
      %s99 = sshll.u32 [#allocation2], 4
      %s100 = int_to_ptr.vmem [resolvable:$true] %s99
      %105 = dma.vmem_to_hbm [thread:$0]  %s100, 512, %s3, [#allocation3], 256, 256, 16
    $region17: #{tpu_custom_call.1} parent=1 // pred_fallthru
      _
    // Predicated region
    $region18: #{tpu_custom_call.1} parent=1 // pred_check
      _
    $region19: #{tpu_custom_call.1} parent=1 // pred_check_branch
      %107 = sbr.rel (0) target = $region21
    $region20: #{tpu_custom_call.1} parent=1 // pred_region
      %s109 = ssub.s32 512, 512
      %110 = vsyncadd [#allocation5], %s109
      %s111 = sshll.u32 [#allocation4], 4
      %s112 = int_to_ptr.vmem [resolvable:$true] %s111
      %117 = dma.vmem_to_hbm [thread:$0]  %s112, 512, %s4, [#allocation5], 256, 256, 16
    $region21: #{tpu_custom_call.1} parent=1 // pred_fallthru
      _
    // Predicated region
    $region22: #{tpu_custom_call.1} parent=1 // pred_check
      _
    $region23: #{tpu_custom_call.1} parent=1 // pred_check_branch
      %119 = sbr.rel (0) target = $region25
    $region24: #{tpu_custom_call.1} parent=1 // pred_region
      %120 = dma.done [#allocation3], 512
    $region25: #{tpu_custom_call.1} parent=1 // pred_fallthru
      _
    // Predicated region
    $region26: #{tpu_custom_call.1} parent=1 // pred_check
      _
    $region27: #{tpu_custom_call.1} parent=1 // pred_check_branch
      %122 = sbr.rel (0) target = $region29
    $region28: #{tpu_custom_call.1} parent=1 // pred_region
      %123 = dma.done [#allocation5], 512
    $region29: #{tpu_custom_call.1} parent=1 // pred_fallthru
      _
    %124 = vsyncpa [#allocation3], 1
    %125 = vsyncpa [#allocation5], 1

</llo_original>
